<compile_context>
chip_gen: v7x
topology: tpu7x:2x2x1
jax: 0.10.0
libtpu: 0.0.40
codegen_flags: <defaults>
</compile_context>

<pallas_src>
import functools

import jax
import jax.numpy as jnp
import numpy as np
from jax import lax
from jax.experimental import pallas as pl
from jax.experimental.pallas import tpu as pltpu


def _round_up(x, m):
    return (x + m - 1) // m * m


def _largest_divisor_leq(n, cap):
    cap = int(max(1, min(n, cap)))
    for d in range(cap, 0, -1):
        if n % d == 0:
            return d
    return 1


def _vmem_budget_bytes():
    """~75% of this generation's physical VMEM (v5e/v6e 128 MiB, v7x 64 MiB)."""
    try:
        cap = int(pltpu.get_tpu_info().vmem_capacity_bytes)
    except Exception:
        cap = 64 << 20          # conservative fallback, safe on every generation
    return max(16 << 20, int(0.75 * cap))


def _choose_layout(Cg, S, itemsize):
    """Fold each (Cg, S) slab into (R, L) = (Cg*k, S//k) with L % 128 == 0.

    Returns (k, L, pad): `pad` zero columns are appended to S per channel when
    no exact lane-dense factorisation exists (then k == 1, minimal padding).
    """
    sub = max(8, 32 // itemsize)            # sublane target: 8 f32 / 16 bf16 / 32 int8
    best = None
    for k in range(1, min(S, 64) + 1):
        if S % k:
            continue
        L = S // k
        if L % 128:
            continue
        R = Cg * k
        key = (R / _round_up(R, sub), L)    # sublane occupancy first, then wide lanes
        if best is None or key > best[0]:
            best = (key, k, L)
    if best is not None:
        return best[1], best[2], 0
    L = _round_up(S, 128)                   # no exact factorisation: minimal zero pad
    return 1, L, L - S


def _sum_last2(v):
    """Sum over the last two axes (staged lane- then sublane-reduce), keepdims."""
    return jnp.sum(jnp.sum(v, axis=-1, keepdims=True), axis=-2, keepdims=True)


# ----------------------------------------------------------------------------
# Kernels
# ----------------------------------------------------------------------------
def _agn_fused_kernel(x_ref, coef_ref, o_ref, *, eps, inv_n, inv_r, pad_count,
                      bf16_apply):
    """bb (batch, group) slabs per grid step.

    x_ref:    (bb, R, L)  input slabs
    coef_ref: (bb, R, 2)  per-row [1 + scale, shift], f32
    o_ref:    (bb, R, L)  output
    """
    xf = x_ref[...].astype(jnp.float32)
    # Pivot-shifted single-pass statistics (pivot = mean of lane 0 per slab).
    p0 = _sum_last2(xf[:, :, 0:1]) * inv_r                  # (bb, 1, 1)
    xs = xf - p0
    s1 = _sum_last2(xs)                                     # sum(x - p0)
    s2 = _sum_last2(xs * xs)                                # sum((x - p0)^2)
    if pad_count:       # zero-padded columns contributed (-p0) / p0^2 per entry
        s1 = s1 + pad_count * p0
        s2 = s2 - pad_count * (p0 * p0)
    ms = s1 * inv_n
    mean = p0 + ms
    var = jnp.maximum(s2 * inv_n - ms * ms, 0.0)
    inv = lax.rsqrt(var + eps)                              # (bb, 1, 1), EUP

    mult = coef_ref[..., 0:1]                               # (bb, R, 1) = 1 + scale
    add = coef_ref[..., 1:2]                                # (bb, R, 1) = shift
    a = inv * mult
    b = add - mean * a
    # Re-read x from VMEM for the apply sweep (keeps the f32 temp's live range
    # from spanning the reductions).
    if bf16_apply:
        o_ref[...] = x_ref[...] * a.astype(jnp.bfloat16) + b.astype(jnp.bfloat16)
    else:
        o_ref[...] = (x_ref[...].astype(jnp.float32) * a + b).astype(o_ref.dtype)


def _agn_tiled_kernel(x_ref, coef_ref, o_ref, s1_ref, s2_ref, p0_ref, *,
                      eps, inv_n, inv_r, pad_count, bf16_apply):
    """S-tiled two-phase path for slabs too large to keep resident in VMEM.

    grid = (BG, 2, NC): phase 0 accumulates the sums over the S chunks,
    phase 1 re-reads x and applies x*a + b (x read twice, 3x HBM traffic).
    """
    phase = pl.program_id(1)
    chunk = pl.program_id(2)

    @pl.when(jnp.logical_and(phase == 0, chunk == 0))
    def _():
        p0_ref[...] = _sum_last2(x_ref[:, :, 0:1].astype(jnp.float32)) * inv_r
        s1_ref[...] = jnp.zeros_like(s1_ref)
        s2_ref[...] = jnp.zeros_like(s2_ref)

    @pl.when(phase == 0)
    def _():
        xs = x_ref[...].astype(jnp.float32) - p0_ref[...]
        s1_ref[...] += _sum_last2(xs)
        s2_ref[...] += _sum_last2(xs * xs)

    @pl.when(phase == 1)
    def _():
        p0 = p0_ref[...]
        s1 = s1_ref[...]
        s2 = s2_ref[...]
        if pad_count:
            s1 = s1 + pad_count * p0
            s2 = s2 - pad_count * (p0 * p0)
        ms = s1 * inv_n
        mean = p0 + ms
        var = jnp.maximum(s2 * inv_n - ms * ms, 0.0)
        inv = lax.rsqrt(var + eps)
        mult = coef_ref[..., 0:1]
        add = coef_ref[..., 1:2]
        a = inv * mult
        b = add - mean * a
        if bf16_apply:
            o_ref[...] = x_ref[...] * a.astype(jnp.bfloat16) + b.astype(jnp.bfloat16)
        else:
            o_ref[...] = (x_ref[...].astype(jnp.float32) * a + b).astype(o_ref.dtype)


# ----------------------------------------------------------------------------
# Wrapper
# ----------------------------------------------------------------------------
def _apply_act(e, act_fn):
    if act_fn is None:
        return e
    if act_fn in ("silu", "swish"):
        return e * jax.nn.sigmoid(e)
    if act_fn == "relu":
        return jax.nn.relu(e)
    if act_fn == "gelu":
        return jax.nn.gelu(e)
    if act_fn == "mish":
        return e * jnp.tanh(jax.nn.softplus(e))
    # TODO(synk): remaining diffusers activations are not wired up.
    raise NotImplementedError(act_fn)


def ada_group_norm_3d(x, emb, weight, bias, *, num_groups, eps=1e-5, act_fn=None,
                      _force_cols_per_step=None):
    """AdaGroupNorm3d forward.  x: (B, C, D, H, W), emb: (B, E)."""
    B, C, D, H, W = x.shape
    G = num_groups
    assert C % G == 0
    Cg = C // G
    S = D * H * W
    BG = B * G
    itemsize = x.dtype.itemsize
    bf16_apply = x.dtype == jnp.bfloat16
    # TODO(synk): on v5e (no bf16 VPU) an f32 apply would be marginally faster;
    # the dtype-driven choice is kept because it is correct everywhere.

    # ---- timestep-embedding projection: tiny matmul, leave it to XLA ----------
    e = _apply_act(emb.astype(jnp.float32), act_fn)
    proj = e @ weight.astype(jnp.float32).T + bias.astype(jnp.float32)      # (B, 2C)
    scale, shift = jnp.split(proj, 2, axis=1)                               # (B, C)

    # ---- lane-dense slab layout -------------------------------------------------
    k, L, pad = _choose_layout(Cg, S, itemsize)
    R = Cg * k
    pad_count = Cg * pad                 # zero elements added per (batch, group) slab

    xg = x.reshape(BG, Cg, S)
    if pad:
        xg = jnp.pad(xg, ((0, 0), (0, 0), (0, pad)))
    xg = xg.reshape(BG, R, L)

    coef = jnp.stack([(1.0 + scale).reshape(BG, Cg),
                      shift.reshape(BG, Cg)], axis=-1).astype(jnp.float32)  # (BG,Cg,2)
    if k > 1:
        coef = jnp.repeat(coef, k, axis=1)                                  # (BG, R, 2)

    # ---- VMEM budgeting (generation aware) ---------------------------------------
    budget = _vmem_budget_bytes()
    slab_bytes = R * L * itemsize
    slab_f32 = R * L * 4
    coef_blk = 2 * _round_up(R, 8) * 128 * 4     # one double-buffered coef block
    per_slab = 4 * slab_bytes + 2 * slab_f32 + coef_blk
    headroom = 6 << 20

    kern_kwargs = dict(eps=float(eps), inv_n=1.0 / float(Cg * S),
                       inv_r=1.0 / float(R), pad_count=float(pad_count),
                       bf16_apply=bf16_apply)

    use_tiled = (_force_cols_per_step is not None) or (per_slab + headroom > budget)

    if not use_tiled:
        # ---- fused single-sweep path: bb slabs per grid step ----------------------
        bb_target = max(1, (1 << 20) // slab_bytes)        # ~>= 1 MiB of x per step
        bb_fit = max(1, (budget - headroom) // per_slab)
        bb_grid = BG // 2 if BG >= 2 else 1                # keep >= 2 steps (v7x cores)
        bb = _largest_divisor_leq(BG, min(bb_target, bb_fit, max(1, bb_grid)))
        vmem_limit = int(min(budget, max(bb * per_slab + headroom, 16 << 20)))

        cost = pl.CostEstimate(
            flops=10 * xg.size, transcendentals=BG,
            bytes_accessed=2 * xg.size * itemsize + coef.size * 4)

        out = pl.pallas_call(
            functools.partial(_agn_fused_kernel, **kern_kwargs),
            out_shape=jax.ShapeDtypeStruct((BG, R, L), x.dtype),
            grid=(BG // bb,),
            in_specs=[
                pl.BlockSpec((bb, R, L), lambda i: (i, 0, 0)),
                pl.BlockSpec((bb, R, 2), lambda i: (i, 0, 0)),
            ],
            out_specs=pl.BlockSpec((bb, R, L), lambda i: (i, 0, 0)),
            compiler_params=pltpu.CompilerParams(
                dimension_semantics=("parallel",),
                vmem_limit_bytes=vmem_limit),
            cost_estimate=cost,
        )(xg, coef)
    else:
        # ---- S-tiled two-phase path (stats pass, then apply pass) ------------------
        per_col = 4 * R * itemsize + 2 * R * 4             # dbl-buffered in/out + temps
        lc_max = max(128, (budget - headroom - coef_blk) // per_col)
        Lc = 128
        for c in range(128, L + 1, 128):
            if L % c == 0 and c <= lc_max:
                Lc = c
        if _force_cols_per_step is not None:
            assert _force_cols_per_step % 128 == 0 and L % _force_cols_per_step == 0
            Lc = _force_cols_per_step
        NC = L // Lc
        vmem_limit = int(min(budget, max(Lc * per_col + coef_blk + headroom, 16 << 20)))

        cost = pl.CostEstimate(
            flops=10 * xg.size, transcendentals=BG,
            bytes_accessed=3 * xg.size * itemsize + coef.size * 4)

        out = pl.pallas_call(
            functools.partial(_agn_tiled_kernel, **kern_kwargs),
            out_shape=jax.ShapeDtypeStruct((BG, R, L), x.dtype),
            grid=(BG, 2, NC),
            in_specs=[
                pl.BlockSpec((1, R, Lc), lambda i, p, c: (i, 0, c)),
                pl.BlockSpec((1, R, 2), lambda i, p, c: (i, 0, 0)),
            ],
            # Phase 0: park the output window on chunk 0 (never written back
            # until phase 1 has filled it).  Phase 1: walk the chunks.
            out_specs=pl.BlockSpec((1, R, Lc), lambda i, p, c: (i, 0, c * p)),
            scratch_shapes=[pltpu.VMEM((1, 1, 1), jnp.float32)] * 3,
            compiler_params=pltpu.CompilerParams(
                dimension_semantics=("parallel", "arbitrary", "arbitrary"),
                vmem_limit_bytes=vmem_limit),
            cost_estimate=cost,
        )(xg, coef)

    out = out.reshape(BG, Cg, k * L)[:, :, :S]
    return out.reshape(B, C, D, H, W)


# ----------------------------------------------------------------------------
# Pure-JAX reference (mirrors the PyTorch forward) for correctness checks.
# ----------------------------------------------------------------------------
def _reference(x, emb, weight, bias, num_groups, eps, act_fn):
    e = _apply_act(emb.astype(jnp.float32), act_fn)
    out = e @ weight.astype(jnp.float32).T + bias.astype(jnp.float32)
    scale, shift = jnp.split(out, 2, axis=1)
    B, C, D, H, W = x.shape
    xg = x.astype(jnp.float32).reshape(B, num_groups, -1)
    mean = xg.mean(-1, keepdims=True)
    var = xg.var(-1, keepdims=True)
    xn = ((xg - mean) / jnp.sqrt(var + eps)).reshape(B, C, D, H, W)
    return xn * (1.0 + scale)[:, :, None, None, None] + shift[:, :, None, None, None]


def _check(x, emb, w, b, *, num_groups, eps, act_fn, **kw):
    y = jax.block_until_ready(
        ada_group_norm_3d(x, emb, w, b, num_groups=num_groups, eps=eps,
                          act_fn=act_fn, **kw))
    y_ref = _reference(x, emb, w, b, num_groups, eps, act_fn)
    np.testing.assert_allclose(np.asarray(y, dtype=np.float32),
                               np.asarray(y_ref), rtol=1e-4, atol=1e-4)


if __name__ == "__main__":
    embedding_dim = 32
    eps = 1e-5
    key = jax.random.PRNGKey(0)

    def make(keys, B, C, D, H, W):
        kx, ke, kw, kb = keys
        x = jax.random.normal(kx, (B, C, D, H, W), dtype=jnp.float32)
        emb = jax.random.normal(ke, (B, embedding_dim), dtype=jnp.float32)
        bound = 1.0 / np.sqrt(embedding_dim)
        w = jax.random.uniform(kw, (C * 2, embedding_dim), minval=-bound,
                               maxval=bound, dtype=jnp.float32)
        b = jax.random.uniform(kb, (C * 2,), minval=-bound, maxval=bound,
                               dtype=jnp.float32)
        return x, emb, w, b

    keys = jax.random.split(key, 12)

    # 1) main fused path: B=2, C=4, groups=2, (D,H,W)=(4,8,8), silu embedding act.
    x, emb, w, b = make(keys[0:4], 2, 4, 4, 8, 8)
    _check(x, emb, w, b, num_groups=2, eps=eps, act_fn="silu")

    # 2) S-tiled two-phase fallback (forced small chunk so NC > 1).
    x, emb, w, b = make(keys[4:8], 1, 8, 2, 8, 32)
    _check(x, emb, w, b, num_groups=2, eps=eps, act_fn="silu",
           _force_cols_per_step=128)

    # 3) awkward spatial size (D*H*W = 105) -> zero-padded lane-dense layout.
    x, emb, w, b = make(keys[8:12], 2, 6, 3, 5, 7)
    _check(x, emb, w, b, num_groups=3, eps=eps, act_fn=None)

    print("KERNEL_OK")
</pallas_src>

<mosaic_0001>
module attributes {stable_mosaic.version = 11 : i64} {
  func.func @_agn_fused_kernel(%arg0: i32, %arg1: memref<2x4x128xf32, #tpu.memory_space<vmem>>, %arg2: memref<2x4x2xf32, #tpu.memory_space<vmem>>, %arg3: memref<2x4x128xf32, #tpu.memory_space<vmem>>) attributes {dimension_semantics = [#tpu.dimension_semantics<parallel>], iteration_bounds = array<i64: 2>, scalar_prefetch = 0 : i64, scratch_operands = 0 : i64, tpu.core_type = #tpu.core_type<tc>, window_params = [{transform_indices = @transform_0, window_bounds = array<i64: 2, 4, 128>}, {transform_indices = @transform_1, window_bounds = array<i64: 2, 4, 2>}, {transform_indices = @transform_2, window_bounds = array<i64: 2, 4, 128>}]} {
    %c0 = arith.constant 0 : index
    %c0_0 = arith.constant 0 : index
    %c0_1 = arith.constant 0 : index
    %0 = vector.load %arg1[%c0, %c0_0, %c0_1] : memref<2x4x128xf32, #tpu.memory_space<vmem>>, vector<2x4x128xf32>
    %1 = vector.extract_strided_slice %0 {offsets = [0, 0, 0], sizes = [2, 4, 1], strides = [1, 1, 1]} : vector<2x4x128xf32> to vector<2x4x1xf32>
    %cst = arith.constant dense<0.000000e+00> : vector<2x4xf32>
    %2 = vector.multi_reduction <add>, %1, %cst [2] : vector<2x4x1xf32> to vector<2x4xf32>
    %3 = vector.shape_cast %2 : vector<2x4xf32> to vector<2x4x1xf32>
    %cst_2 = arith.constant dense<0.000000e+00> : vector<2x1xf32>
    %4 = vector.multi_reduction <add>, %3, %cst_2 [1] : vector<2x4x1xf32> to vector<2x1xf32>
    %5 = vector.shape_cast %4 : vector<2x1xf32> to vector<2x1x1xf32>
    %cst_3 = arith.constant 2.500000e-01 : f32
    %6 = vector.broadcast %cst_3 : f32 to vector<2x1x1xf32>
    %7 = arith.mulf %5, %6 : vector<2x1x1xf32>
    %8 = vector.broadcast %7 : vector<2x1x1xf32> to vector<2x4x128xf32>
    %9 = arith.subf %0, %8 : vector<2x4x128xf32>
    %cst_4 = arith.constant dense<0.000000e+00> : vector<2x4xf32>
    %10 = vector.multi_reduction <add>, %9, %cst_4 [2] : vector<2x4x128xf32> to vector<2x4xf32>
    %11 = vector.shape_cast %10 : vector<2x4xf32> to vector<2x4x1xf32>
    %cst_5 = arith.constant dense<0.000000e+00> : vector<2x1xf32>
    %12 = vector.multi_reduction <add>, %11, %cst_5 [1] : vector<2x4x1xf32> to vector<2x1xf32>
    %13 = vector.shape_cast %12 : vector<2x1xf32> to vector<2x1x1xf32>
    %14 = arith.mulf %9, %9 : vector<2x4x128xf32>
    %cst_6 = arith.constant dense<0.000000e+00> : vector<2x4xf32>
    %15 = vector.multi_reduction <add>, %14, %cst_6 [2] : vector<2x4x128xf32> to vector<2x4xf32>
    %16 = vector.shape_cast %15 : vector<2x4xf32> to vector<2x4x1xf32>
    %cst_7 = arith.constant dense<0.000000e+00> : vector<2x1xf32>
    %17 = vector.multi_reduction <add>, %16, %cst_7 [1] : vector<2x4x1xf32> to vector<2x1xf32>
    %18 = vector.shape_cast %17 : vector<2x1xf32> to vector<2x1x1xf32>
    %cst_8 = arith.constant 0.001953125 : f32
    %19 = vector.broadcast %cst_8 : f32 to vector<2x1x1xf32>
    %20 = arith.mulf %13, %19 : vector<2x1x1xf32>
    %21 = arith.addf %7, %20 : vector<2x1x1xf32>
    %cst_9 = arith.constant 0.001953125 : f32
    %22 = vector.broadcast %cst_9 : f32 to vector<2x1x1xf32>
    %23 = arith.mulf %18, %22 : vector<2x1x1xf32>
    %24 = arith.mulf %20, %20 : vector<2x1x1xf32>
    %25 = arith.subf %23, %24 : vector<2x1x1xf32>
    %cst_10 = arith.constant 0.000000e+00 : f32
    %26 = vector.broadcast %cst_10 : f32 to vector<2x1x1xf32>
    %27 = arith.maximumf %25, %26 : vector<2x1x1xf32>
    %cst_11 = arith.constant 9.99999974E-6 : f32
    %28 = vector.broadcast %cst_11 : f32 to vector<2x1x1xf32>
    %29 = arith.addf %27, %28 : vector<2x1x1xf32>
    %30 = math.rsqrt %29 : vector<2x1x1xf32>
    %c0_12 = arith.constant 0 : index
    %c0_13 = arith.constant 0 : index
    %c0_14 = arith.constant 0 : index
    %31 = vector.load %arg2[%c0_12, %c0_13, %c0_14] : memref<2x4x2xf32, #tpu.memory_space<vmem>>, vector<2x4x1xf32>
    %c0_15 = arith.constant 0 : index
    %c0_16 = arith.constant 0 : index
    %c1 = arith.constant 1 : index
    %32 = vector.load %arg2[%c0_15, %c0_16, %c1] : memref<2x4x2xf32, #tpu.memory_space<vmem>>, vector<2x4x1xf32>
    %33 = vector.broadcast %30 : vector<2x1x1xf32> to vector<2x4x1xf32>
    %34 = arith.mulf %33, %31 : vector<2x4x1xf32>
    %35 = vector.broadcast %21 : vector<2x1x1xf32> to vector<2x4x1xf32>
    %36 = arith.mulf %35, %34 : vector<2x4x1xf32>
    %37 = arith.subf %32, %36 : vector<2x4x1xf32>
    %c0_17 = arith.constant 0 : index
    %c0_18 = arith.constant 0 : index
    %c0_19 = arith.constant 0 : index
    %38 = vector.load %arg1[%c0_17, %c0_18, %c0_19] : memref<2x4x128xf32, #tpu.memory_space<vmem>>, vector<2x4x128xf32>
    %39 = vector.broadcast %34 : vector<2x4x1xf32> to vector<2x4x128xf32>
    %40 = arith.mulf %38, %39 : vector<2x4x128xf32>
    %41 = vector.broadcast %37 : vector<2x4x1xf32> to vector<2x4x128xf32>
    %42 = arith.addf %40, %41 : vector<2x4x128xf32>
    %c0_20 = arith.constant 0 : index
    %c0_21 = arith.constant 0 : index
    %c0_22 = arith.constant 0 : index
    %43 = vector.load %arg3[%c0_20, %c0_21, %c0_22] : memref<2x4x128xf32, #tpu.memory_space<vmem>>, vector<2x4x128xf32>
    tpu.vector_store %arg3[%c0_20, %c0_21, %c0_22], %42 {strides = array<i32>} : memref<2x4x128xf32, #tpu.memory_space<vmem>>, vector<2x4x128xf32>,
    return
  }
  func.func @transform_0(%arg0: i32) -> (i32, i32, i32) {
    %c0_i32 = arith.constant 0 : i32
    %c0_i32_0 = arith.constant 0 : i32
    %c0_i32_1 = arith.constant 0 : i32
    return %arg0, %c0_i32, %c0_i32_0 : i32, i32, i32
  }
  func.func @transform_1(%arg0: i32) -> (i32, i32, i32) {
    %c0_i32 = arith.constant 0 : i32
    %c0_i32_0 = arith.constant 0 : i32
    %c0_i32_1 = arith.constant 0 : i32
    return %arg0, %c0_i32, %c0_i32_0 : i32, i32, i32
  }
  func.func @transform_2(%arg0: i32) -> (i32, i32, i32) {
    %c0_i32 = arith.constant 0 : i32
    %c0_i32_0 = arith.constant 0 : i32
    %c0_i32_1 = arith.constant 0 : i32
    return %arg0, %c0_i32, %c0_i32_0 : i32, i32, i32
  }
}

</mosaic_0001>

<llo_original>
// kernel: tpu_custom_call.1
$region0: #{tpu_custom_call.1}
  #allocation0 [shape = 'u32[]', space=smem, size = 0x4, offset = 0x4, fixed_abs, tag = 'smem constant byte address 0x4 - core index']
  #allocation1 [shape = 'u32[144,128]{1,0:T(1,128)}', space=vmem, size = 0x12000, scoped, tag = 'internal scratch']
  %s0 = inlined_call_operand.vmem [shape: f32[4,4,128], index: 0, kind: input, shape index: {}]
  %s1 = inlined_call_operand.vmem [shape: f32[4,4,2], index: 1, kind: input, shape index: {}]
  %s2 = inlined_call_operand.hbm [shape: f32[4,4,128], index: 2, kind: output, shape index: {}]
  %s3 = sld [smem:[#allocation0]]
  $region41: #{tpu_custom_call.1} parent=0
    _
  %s5 = ssub.s32 1, %s3
  %s6 = scalar_select 0, %s5, %s3
  $region1: #{tpu_custom_call.1} parent=0
    #allocation2 [shape = 'u8[8192]{0}', space=vmem, size = 0x2000, scoped, tag = 'output window, operand 0']
    #allocation3 [shape = 's32[2]{0}', space=sflag, size = 0x8, scoped, tag = 'scoped memory for tpu_custom_call.1']
    %7 = vsyncpa [#allocation3], 0
    %s8 = scalar_lea.sflag [#allocation3], 1
    %9 = vsyncpa %s8, 0
    loop: start=0, step=1, limit=4
    $region2: #{tpu_custom_call.1} parent=1 // loop_pre_header
      _
    $region3: #{tpu_custom_call.1} parent=1 // loop_header
      %s11 = sphi 0, %s15
      %p12 = scmp.ge.s32.totalorder %s11, 4
      %s21 = sphi 0, %s23
      %s24 = sphi 0, %s21
      %s25 = sphi 0, %s24
      %s41 = sphi 0, %s25
      %s47 = sphi 0, %s49
      %s50 = sphi 0, %s47
      %s51 = sphi 0, %s50
      %s67 = sphi 0, %s51
      %s73 = sphi 0, %s75
      %s76 = sphi 0, %s73
      %s77 = sphi 0, %s76
      %s93 = sphi 0, %s77
    $region4: #{tpu_custom_call.1} parent=1 // loop_header_branch
      %14 = sbr.rel (%p12) target = $region8
    $region5: #{tpu_custom_call.1} parent=1 // loop_body
      %s16 = ssub.s32 %s11, 1
      %s17 = ssub.s32 %s11, 2
      %s18 = sadd.s32 %s11, 1
      %s19 = ssub.s32 %s11, %s18
      %p20 = scmp.eq.s32.totalorder %s19, 0
      %s22 = sadd.s32 %s21, 1
      %s23 = scalar_select %p20, %s21, %s22
      %p26 = pneg %p20
      %p27 = scmp.eq.s32.totalorder %s11, 1
      %p28 = por %p26, %p27
      %p29 = scmp.ne.s32.totalorder %s21, %s24
      %p30 = scmp.eq.s32.totalorder %s11, 0
      %p31 = por %p29, %p30
      %p32 = scmp.ne.s32.totalorder %s21, %s24
      %p33 = scmp.eq.s32.totalorder %s16, 1
      %p34 = por %p32, %p33
      %p35 = scmp.ne.s32.totalorder %s24, %s25
      %p36 = scmp.eq.s32.totalorder %s16, 0
      %p37 = por %p35, %p36
      %p38 = scmp.ne.s32.totalorder %s24, %s25
      %p39 = scmp.eq.s32.totalorder %s17, 1
      %p40 = por %p38, %p39
      %p42 = scmp.ne.s32.totalorder %s25, %s41
      %p43 = scmp.eq.s32.totalorder %s17, 0
      %p44 = por %p42, %p43
      %s45 = ssub.s32 %s11, %s18
      %p46 = scmp.eq.s32.totalorder %s45, 0
      %s48 = sadd.s32 %s47, 1
      %s49 = scalar_select %p46, %s47, %s48
      %p52 = pneg %p46
      %p53 = scmp.eq.s32.totalorder %s11, 1
      %p54 = por %p52, %p53
      %p55 = scmp.ne.s32.totalorder %s47, %s50
      %p56 = scmp.eq.s32.totalorder %s11, 0
      %p57 = por %p55, %p56
      %p58 = scmp.ne.s32.totalorder %s47, %s50
      %p59 = scmp.eq.s32.totalorder %s16, 1
      %p60 = por %p58, %p59
      %p61 = scmp.ne.s32.totalorder %s50, %s51
      %p62 = scmp.eq.s32.totalorder %s16, 0
      %p63 = por %p61, %p62
      %p64 = scmp.ne.s32.totalorder %s50, %s51
      %p65 = scmp.eq.s32.totalorder %s17, 1
      %p66 = por %p64, %p65
      %p68 = scmp.ne.s32.totalorder %s51, %s67
      %p69 = scmp.eq.s32.totalorder %s17, 0
      %p70 = por %p68, %p69
      %s71 = ssub.s32 %s11, %s18
      %p72 = scmp.eq.s32.totalorder %s71, 0
      %s74 = sadd.s32 %s73, 1
      %s75 = scalar_select %p72, %s73, %s74
      %p78 = pneg %p72
      %p79 = scmp.eq.s32.totalorder %s11, 1
      %p80 = por %p78, %p79
      %p81 = scmp.ne.s32.totalorder %s73, %s76
      %p82 = scmp.eq.s32.totalorder %s11, 0
      %p83 = por %p81, %p82
      %p84 = scmp.ne.s32.totalorder %s73, %s76
      %p85 = scmp.eq.s32.totalorder %s16, 1
      %p86 = por %p84, %p85
      %p87 = scmp.ne.s32.totalorder %s76, %s77
      %p88 = scmp.eq.s32.totalorder %s16, 0
      %p89 = por %p87, %p88
      %p90 = scmp.ne.s32.totalorder %s76, %s77
      %p91 = scmp.eq.s32.totalorder %s17, 1
      %p92 = por %p90, %p91
      %p94 = scmp.ne.s32.totalorder %s77, %s93
      %p95 = scmp.eq.s32.totalorder %s17, 0
      %p96 = por %p94, %p95
      %p97 = scmp.le.s32.totalorder 1, %s11
      %p98 = scmp.lt.s32.totalorder %s11, 3
      %p99 = pnand %p97, %p98
      %p100 = pneg %p99
      // Predicated region
      $region9: #{tpu_custom_call.1} parent=5 // pred_check
        _
      $region10: #{tpu_custom_call.1} parent=5 // pred_check_branch
        %102 = sbr.rel (%p99) target = $region12
      $region11: #{tpu_custom_call.1} parent=5 // pred_region
        %s103 = ssub.s32 %s11, 1
      $region12: #{tpu_custom_call.1} parent=5 // pred_fallthru
        _
      %p104 = scmp.lt.s32.totalorder %s11, 2
      // Predicated region
      $region13: #{tpu_custom_call.1} parent=5 // pred_check
        %p105 = pneg %p104
      $region14: #{tpu_custom_call.1} parent=5 // pred_check_branch
        %107 = sbr.rel (%p105) target = $region16
      $region15: #{tpu_custom_call.1} parent=5 // pred_region
        // Predicated region
        $region17: #{tpu_custom_call.1} parent=15 // pred_check
          %p108 = pneg %p31
        $region18: #{tpu_custom_call.1} parent=15 // pred_check_branch
          %110 = sbr.rel (%p108) target = $region20
        $region19: #{tpu_custom_call.1} parent=15 // pred_region
          %s111 = smul.u32 2, %s11
          %p112 = scmp.lt.s32.totalorder %s111, 3
          %s113 = scalar_select %p112, %s111, 3
          %s114 = smul.addr %s113, 4
          %s115 = scalar_lea.vmem %s0, %s114
          %s116 = smul.u32 2, %s11
        $region20: #{tpu_custom_call.1} parent=15 // pred_fallthru
          _
        // Predicated region
        $region21: #{tpu_custom_call.1} parent=15 // pred_check
          %p117 = pneg %p57
        $region22: #{tpu_custom_call.1} parent=15 // pred_check_branch
          %119 = sbr.rel (%p117) target = $region24
        $region23: #{tpu_custom_call.1} parent=15 // pred_region
          %s120 = smul.u32 2, %s11
          %p121 = scmp.lt.s32.totalorder %s120, 3
          %s122 = scalar_select %p121, %s120, 3
          %s123 = smul.addr %s122, 4
          %s124 = scalar_lea.vmem %s1, %s123
          %s125 = smul.u32 2, %s11
        $region24: #{tpu_custom_call.1} parent=15 // pred_fallthru
          _
      $region16: #{tpu_custom_call.1} parent=5 // pred_fallthru
        _
      %p126 = scmp.le.s32.totalorder 1, %s11
      %p127 = scmp.lt.s32.totalorder %s11, 3
      %p128 = pnand %p126, %p127
      %p129 = pneg %p128
      // Predicated region
      $region25: #{tpu_custom_call.1} parent=5 // pred_check
        _
      $region26: #{tpu_custom_call.1} parent=5 // pred_check_branch
        %131 = sbr.rel (%p128) target = $region28
      $region27: #{tpu_custom_call.1} parent=5 // pred_region
        %s132 = ssub.s32 %s11, 1
        %s133 = smul.u32 2, %s16
        %p134 = scmp.lt.s32.totalorder %s133, 3
        %s135 = scalar_select %p134, %s133, 3
        %s136 = smul.addr %s135, 4
        %s137 = scalar_lea.vmem %s0, %s136
        %p138 = pneg %p37
        %p139 = pneg %p34
        %s140 = smul.u32 2, %s16
        %p141 = scmp.lt.s32.totalorder %s140, 3
        %s142 = scalar_select %p141, %s140, 3
        %s143 = smul.addr %s142, 4
        %s144 = scalar_lea.vmem %s1, %s143
        %p145 = pneg %p63
        %p146 = pneg %p60
        %p147 = pneg %p89
        %p148 = pneg %p86
        %s149 = sand.u32 %s76, 1
        %s150 = scalar_lea.sflag [#allocation3], %s149
        %s151 = sand.u32 %s76, 1
        %s152 = smul.addr %s151, 8
        %s153 = scalar_lea.vmem [#allocation2], %s152
        %s154 = smul.u32 2, %s16
        %p155 = scmp.lt.s32.totalorder %s154, 3
        %s156 = scalar_select %p155, %s154, 3
        %s157 = smul.addr %s156, 4
        %s158 = scalar_lea.vmem %s0, %s157
        %s159 = smul.u32 2, %s16
        %s160 = smul.u32 2, %s16
        %p161 = scmp.lt.s32.totalorder %s160, 3
        %s162 = scalar_select %p161, %s160, 3
        %s163 = smul.addr %s162, 4
        %s164 = scalar_lea.vmem %s1, %s163
        %s165 = smul.u32 2, %s16
        %s166 = smul.u32 2, %s16
        %v167 = vld [vmem:[%s158] sm:$0xf]
        %v168 = vld [vmem:[%s158 + $0x4] sm:$0xf]
        %v169 = vadd.f32 %v167, 0.0
        %v170 = vadd.f32 %v168, 0.0
        %vm171 = vcmask 3072
        %v172 = vsel %vm171, %v169, 0.0
        %v173 = vrot.slane %v172, 4
        %v174 = vadd.f32 %v172, %v173
        %v175 = vrot.slane %v174, 2
        %v176 = vadd.f32 %v174, %v175
        %v177 = vrot.slane %v176, 1
        %v178 = vadd.f32 %v176, %v177
        %v179 = vsel %vm171, %v170, 0.0
        %v180 = vrot.slane %v179, 4
        %v181 = vadd.f32 %v179, %v180
        %v182 = vrot.slane %v181, 2
        %v183 = vadd.f32 %v181, %v182
        %v184 = vrot.slane %v183, 1
        %v185 = vadd.f32 %v183, %v184
        %v186 = vmul.f32 %v178, 0.25
        %v187 = vmul.f32 %v185, 0.25
        %189 = vset.pattern.permute.xlu0 0
        %190 = vperm.xlu0 %189, %v186
        %v191 = vpop.permute.xlu0 %190
        %194 = vset.pattern.permute.xlu0 0
        %195 = vperm.xlu0 %194, %v187
        %v196 = vpop.permute.xlu0 %195
        %v198 = vsub.f32 %v167, %v191
        %v199 = vsub.f32 %v168, %v196
        %vm200 = vcmask 1043456
        %v201 = vsel %vm200, %v198, 0.0
        %202 = vadd.xlane.f32.xlu0 %v201
        %v203 = vpop.xlane.xlu0 %202
        %v204 = vsel %vm200, %v199, 0.0
        %205 = vadd.xlane.f32.xlu0 %v204
        %v206 = vpop.xlane.xlu0 %205
        %v207 = vsel %vm200, %v203, 0.0
        %v208 = vrot.slane %v207, 4
        %v209 = vadd.f32 %v207, %v208
        %v210 = vrot.slane %v209, 2
        %v211 = vadd.f32 %v209, %v210
        %v212 = vrot.slane %v211, 1
        %v213 = vadd.f32 %v211, %v212
        %v214 = vsel %vm200, %v206, 0.0
        %v215 = vrot.slane %v214, 4
        %v216 = vadd.f32 %v214, %v215
        %v217 = vrot.slane %v216, 2
        %v218 = vadd.f32 %v216, %v217
        %v219 = vrot.slane %v218, 1
        %v220 = vadd.f32 %v218, %v219
        %v221 = vmul.f32 %v198, %v198
        %v222 = vmul.f32 %v199, %v199
        %v223 = vsel %vm200, %v221, 0.0
        %224 = vadd.xlane.f32.xlu0 %v223
        %v225 = vpop.xlane.xlu0 %224
        %v226 = vsel %vm200, %v222, 0.0
        %227 = vadd.xlane.f32.xlu0 %v226
        %v228 = vpop.xlane.xlu0 %227
        %v229 = vsel %vm200, %v225, 0.0
        %v230 = vrot.slane %v229, 4
        %v231 = vadd.f32 %v229, %v230
        %v232 = vrot.slane %v231, 2
        %v233 = vadd.f32 %v231, %v232
        %v234 = vrot.slane %v233, 1
        %v235 = vadd.f32 %v233, %v234
        %v236 = vsel %vm200, %v228, 0.0
        %v237 = vrot.slane %v236, 4
        %v238 = vadd.f32 %v236, %v237
        %v239 = vrot.slane %v238, 2
        %v240 = vadd.f32 %v238, %v239
        %v241 = vrot.slane %v240, 1
        %v242 = vadd.f32 %v240, %v241
        %v243 = vmul.f32 %v213, 0.001953125
        %v244 = vmul.f32 %v220, 0.001953125
        %v245 = vadd.f32 %v186, %v243
        %v246 = vadd.f32 %v187, %v244
        %v247 = vmul.f32 %v235, 0.001953125
        %v248 = vmul.f32 %v242, 0.001953125
        %v249 = vmul.f32 %v243, %v243
        %v250 = vmul.f32 %v244, %v244
        %v251 = vsub.f32 %v247, %v249
        %v252 = vsub.f32 %v248, %v250
        %v253 = vmax.f32 %v251, 0.0
        %v254 = vmax.f32 %v252, 0.0
        %v255 = vadd.f32 %v253, 1e-05
        %v256 = vadd.f32 %v254, 1e-05
        %v257 = vrsqrt.pop %v255
        %v258 = vrsqrt.pop %v256
        %v259 = vld [vmem:[%s164] sm:$0xf]
        %v260 = vld [vmem:[%s164 + $0x4] sm:$0xf]
        %v261 = vmul.f32 %v257, %v259
        %v262 = vmul.f32 %v258, %v260
        %v263 = vmul.f32 %v245, %v261
        %v264 = vmul.f32 %v246, %v262
        %267 = vrot.lane.b32.xlu0 %v263, 1
        %v268 = vpop.permute.xlu0 %267
        %269 = vrot.lane.b32.xlu0 %v264, 1
        %v270 = vpop.permute.xlu0 %269
        %v273 = vsub.f32 %v259, %v268
        %v274 = vsub.f32 %v260, %v270
        %276 = vset.pattern.permute.xlu0 0
        %277 = vperm.xlu0 %276, %v261
        %v278 = vpop.permute.xlu0 %277
        %281 = vset.pattern.permute.xlu0 0
        %282 = vperm.xlu0 %281, %v262
        %v283 = vpop.permute.xlu0 %282
        %v285 = vmul.f32 %v167, %v278
        %v286 = vmul.f32 %v168, %v283
        %288 = vset.pattern.permute.xlu0 1
        %289 = vperm.xlu0 %288, %v273
        %v290 = vpop.permute.xlu0 %289
        %293 = vset.pattern.permute.xlu0 1
        %294 = vperm.xlu0 %293, %v274
        %v295 = vpop.permute.xlu0 %294
        %v297 = vadd.f32 %v285, %v290
        %v298 = vadd.f32 %v286, %v295
        %299 = vst [vmem:[%s153] sm:$0xf] %v297
        %300 = vst [vmem:[%s153 + $0x4] sm:$0xf] %v298
        %s301 = sand.u32 %s76, 1
        %s302 = scalar_lea.sflag [#allocation3], %s301
        %s303 = sand.u32 %s76, 1
        %s304 = smul.addr %s303, 8
        %s305 = scalar_lea.vmem [#allocation2], %s304
        // Predicated region
        $region29: #{tpu_custom_call.1} parent=27 // pred_check
          %p306 = pneg %p86
        $region30: #{tpu_custom_call.1} parent=27 // pred_check_branch
          %308 = sbr.rel (%p306) target = $region32
        $region31: #{tpu_custom_call.1} parent=27 // pred_region
          %s309 = smul.u32 2, %s16
          %s311 = ssub.s32 128, 128
          %312 = vsyncadd %s302, %s311
          %s313 = smul.addr %s309, 64
          %s314 = scalar_lea.hbm %s2, %s313
          %s315 = sshll.u32 %s305, 4
          %s316 = int_to_ptr.vmem [resolvable:$true] %s315
          %321 = dma.vmem_to_hbm [thread:$0]  %s316, 128, %s314, %s302, 64, 64, 4
        $region32: #{tpu_custom_call.1} parent=27 // pred_fallthru
          _
      $region28: #{tpu_custom_call.1} parent=5 // pred_fallthru
        _
      %p322 = scmp.le.s32.totalorder 2, %s11
      // Predicated region
      $region33: #{tpu_custom_call.1} parent=5 // pred_check
        %p323 = pneg %p322
      $region34: #{tpu_custom_call.1} parent=5 // pred_check_branch
        %325 = sbr.rel (%p323) target = $region36
      $region35: #{tpu_custom_call.1} parent=5 // pred_region
        %s326 = ssub.s32 %s11, 2
        // Predicated region
        $region37: #{tpu_custom_call.1} parent=35 // pred_check
          %p327 = pneg %p92
        $region38: #{tpu_custom_call.1} parent=35 // pred_check_branch
          %329 = sbr.rel (%p327) target = $region40
        $region39: #{tpu_custom_call.1} parent=35 // pred_region
          %s330 = sand.u32 %s77, 1
          %s331 = scalar_lea.sflag [#allocation3], %s330
          %s332 = sand.u32 %s77, 1
          %s333 = smul.addr %s332, 8
          %s334 = scalar_lea.vmem [#allocation2], %s333
          %335 = dma.done %s331, 128
        $region40: #{tpu_custom_call.1} parent=35 // pred_fallthru
          _
      $region36: #{tpu_custom_call.1} parent=5 // pred_fallthru
        _
    $region6: #{tpu_custom_call.1} parent=1 // loop_footer
      %s15 = sadd.s32 1, %s11
    $region7: #{tpu_custom_call.1} parent=1 // loop_footer_branch
      %10 = sbr.rel target = $region3
    $region8: #{tpu_custom_call.1} parent=1 // loop_exit
      _
    %336 = vsyncpa [#allocation3], 1
    %s337 = scalar_lea.sflag [#allocation3], 1
    %338 = vsyncpa %s337, 1

</llo_original>
